<compile_context>
chip_gen: v5e
topology: v5e:2x2
jax: 0.10.0
libtpu: 0.0.40
codegen_flags: <defaults>
</compile_context>

<pallas_src>
import functools

import numpy as np
import jax
import jax.numpy as jnp
from jax import lax
from jax.experimental import pallas as pl
from jax.experimental.pallas import tpu as pltpu

_SUBLANE = 8
_LANE = 128
_BLOCK_BUDGET_BYTES = 4 * 1024 * 1024     # per input block (x2 for double buffering)
_MAX_TILE_N = 512                         # row cap per block
_SPLIT_BYTES = 2 * 1024 * 1024            # force >=2 grid steps above this total size
_VMEM_CAP = 48 * 1024 * 1024              # conservative for v7x (64 MiB physical)


def _round_up(x, m):
    return (x + m - 1) // m * m


def _divisors(n):
    divs = []
    i = 1
    while i * i <= n:
        if n % i == 0:
            divs.append(i)
            if i != n // i:
                divs.append(n // i)
        i += 1
    return sorted(divs)


def _choose_tiles(Np, H, W, itemsize):
    """Pick (tile_n, tile_h): rows of the (Np, H*W) view / image rows per block.

    tile_h always divides H and tile_n always divides Np, so the wrapper never
    has to jnp.pad the tensor (no extra HBM pass).
    """
    budget = _BLOCK_BUDGET_BYTES
    S = H * W
    divs = _divisors(H)
    # Lane-dense candidates: whole-row tiles whose width is a multiple of 128.
    lane_dense = sorted((d for d in divs if (d * W) % _LANE == 0), reverse=True)

    tile_h = None
    for rows_hint in (64, _SUBLANE):
        for d in lane_dense:
            if d * W * rows_hint * itemsize <= budget:
                tile_h = d
                break
        if tile_h is not None:
            break
    if tile_h is None:
        # No 128-aligned whole-row tiling fits; use the full spatial extent
        # (block minor dim == full array dim is always a legal BlockSpec).
        # TODO(synk): a padded-S tiling would be needed for extreme W where even
        # one 8-row full-S block blows past VMEM; not implemented here.
        tile_h = H
    tile_s = tile_h * W

    # Largest multiple of 8 that divides Np, fits the budget and the row cap.
    max_rows = max(_SUBLANE, budget // (tile_s * itemsize))
    tile_n = _SUBLANE
    tn = _SUBLANE
    limit = min(max_rows, _MAX_TILE_N, Np)
    while tn <= limit:
        if Np % tn == 0:
            tile_n = tn
        tn += _SUBLANE

    # v7x: make sure non-trivial inputs get >= 2 grid steps so both TensorCores
    # are used ("parallel" semantics shard the grid across cores).
    if Np // tile_n == 1 and S // tile_s == 1 and Np * S * itemsize > _SPLIT_BYTES:
        if tile_n > _SUBLANE:
            tn = tile_n - _SUBLANE
            while tn >= _SUBLANE:
                if Np % tn == 0:
                    tile_n = tn
                    break
                tn -= _SUBLANE

    return tile_n, tile_h


def _freq_grad_kernel(x_ref, mask_ref, o_ref, *, tile_n, tile_s, n_rows, fold, ragged):
    """One (tile_n, tile_s) block of the (B*C, H*W) view -> (8, out_lanes) partials."""
    n_groups = tile_n // _SUBLANE
    acc = jnp.zeros((_SUBLANE, tile_s), jnp.float32)

    # Stream per 8-row sublane group: load -> rotate -> abs-diff -> accumulate.
    # Temporaries stay (8, tile_s); no full-block intermediates hit VMEM.
    for g in range(n_groups):
        xg = x_ref[g * _SUBLANE:(g + 1) * _SUBLANE, :].astype(jnp.float32)
        # Right neighbour along the flattened W axis (single XLU lane rotate):
        # xn[:, j] = xg[:, (j + 1) % tile_s]; the wrap column is masked below.
        xn = pltpu.roll(xg, shift=tile_s - 1, axis=1)
        d = jnp.abs(xg - xn)
        if ragged and g == n_groups - 1:
            # B*C is not a multiple of 8: only the last sublane group of the last
            # row-block can contain out-of-bounds rows. Zero them with a select
            # so garbage (possibly NaN) OOB data cannot leak into the sum.
            row0 = pl.program_id(0) * tile_n + g * _SUBLANE
            rows = row0 + lax.broadcasted_iota(jnp.int32, (_SUBLANE, 1), 0)
            d = jnp.where(rows < n_rows, d, 0.0)
        acc = acc + d

    # Kill pairs that cross an image row (w == W-1): precomputed multiplicative
    # mask, applied once to the folded (8, tile_s) partial (broadcast over
    # sublanes) instead of per-element iota/mod/compare/select.
    acc = acc * mask_ref[...]

    if fold:
        # Fold lanes down to one 128-wide vreg column: tiny, lane-dense,
        # unmasked store; output traffic becomes negligible.
        folded = acc[:, 0:_LANE]
        for c in range(1, tile_s // _LANE):
            folded = folded + acc[:, c * _LANE:(c + 1) * _LANE]
        o_ref[0, 0, :, :] = folded
    else:
        o_ref[0, 0, :, :] = acc


def freq_grad_loss(a):
    """a: (B, C, H, W). Returns scalar f32 == mean(|a[...,:-1] - a[...,1:]|)."""
    B, C, H, W = a.shape
    assert W >= 2, "FreqGradLoss needs W >= 2"
    N = B * C
    S = H * W
    itemsize = a.dtype.itemsize
    Np = _round_up(N, _SUBLANE)

    tile_n, tile_h = _choose_tiles(Np, H, W, itemsize)
    tile_s = tile_h * W
    gn = Np // tile_n
    gs = S // tile_s
    fold = (tile_s % _LANE == 0)
    out_lanes = _LANE if fold else tile_s
    ragged = (Np != N)

    # Lane-dense view: minor dim = H*W. No padding, no extra HBM pass.
    a2 = a.reshape(N, S)

    # Precomputed multiplicative mask for one spatial tile (tile_s is a multiple
    # of W, so the pattern is identical for every tile): 0.0 at w == W-1.
    mask_np = ((np.arange(tile_s) % W) != (W - 1)).astype(np.float32)
    mask = jnp.asarray(mask_np).reshape(1, tile_s)

    kernel = functools.partial(
        _freq_grad_kernel,
        tile_n=tile_n, tile_s=tile_s, n_rows=N, fold=fold, ragged=ragged)

    block_bytes = tile_n * tile_s * itemsize
    vmem_limit = int(min(_VMEM_CAP, max(32 * 1024 * 1024, 3 * block_bytes + (4 << 20))))

    partials = pl.pallas_call(
        kernel,
        out_shape=jax.ShapeDtypeStruct((gn, gs, _SUBLANE, out_lanes), jnp.float32),
        grid_spec=pltpu.PrefetchScalarGridSpec(
            num_scalar_prefetch=0,
            grid=(gn, gs),
            in_specs=[
                pl.BlockSpec((tile_n, tile_s), lambda i, j: (i, j)),
                pl.BlockSpec((1, tile_s), lambda i, j: (0, 0)),   # mask: fetched once
            ],
            out_specs=pl.BlockSpec((1, 1, _SUBLANE, out_lanes),
                                   lambda i, j: (i, j, 0, 0)),
        ),
        compiler_params=pltpu.CompilerParams(
            dimension_semantics=("parallel", "parallel"),
            vmem_limit_bytes=vmem_limit,
        ),
    )(a2, mask)

    # Tiny final reduction + normalization outside the kernel (keeps the grid
    # fully parallel; divisor uses the true element count).
    count = B * C * H * (W - 1)
    return jnp.sum(partials) / jnp.float32(count)


def freq_grad_loss_ref(a):
    """Pure-JAX reference matching the PyTorch module."""
    a = a.astype(jnp.float32)
    return jnp.mean(jnp.abs(a[:, :, :, :-1] - a[:, :, :, 1:]))


if __name__ == "__main__":
    key = jax.random.PRNGKey(0)
    B, C, H, W = 2, 4, 16, 16
    a = jax.random.normal(key, (B, C, H, W), dtype=jnp.float32)

    loss = jax.block_until_ready(freq_grad_loss(a))
    ref = jax.block_until_ready(freq_grad_loss_ref(a))

    assert jnp.allclose(loss, ref, rtol=1e-5, atol=1e-6), (loss, ref)
    print("KERNEL_OK")
</pallas_src>

<mosaic_0001>
module attributes {stable_mosaic.version = 11 : i64} {
  func.func @_freq_grad_kernel(%arg0: i32, %arg1: i32, %arg2: memref<8x256xf32, #tpu.memory_space<vmem>>, %arg3: memref<1x256xf32, #tpu.memory_space<vmem>>, %arg4: memref<1x1x8x128xf32, #tpu.memory_space<vmem>>) attributes {dimension_semantics = [#tpu.dimension_semantics<parallel>, #tpu.dimension_semantics<parallel>], iteration_bounds = array<i64: 1, 1>, scalar_prefetch = 0 : i64, scratch_operands = 0 : i64, tpu.core_type = #tpu.core_type<tc>, window_params = [{transform_indices = @transform_0, window_bounds = array<i64: 8, 256>}, {pipeline_mode = #tpu.pipeline_mode<synchronous>, transform_indices = @transform_1, window_bounds = array<i64: 1, 256>}, {transform_indices = @transform_2, window_bounds = array<i64: 1, 1, 8, 128>}]} {
    %cst = arith.constant 0.000000e+00 : f32
    %0 = vector.broadcast %cst : f32 to vector<8x256xf32>
    %c0 = arith.constant 0 : index
    %c0_0 = arith.constant 0 : index
    %1 = vector.load %arg2[%c0, %c0_0] : memref<8x256xf32, #tpu.memory_space<vmem>>, vector<8x256xf32>
    %c255_i32 = arith.constant 255 : i32
    %2 = tpu.dynamic_rotate %1 by %c255_i32 dim 1 : vector<8x256xf32>, i32 -> vector<8x256xf32>
    %3 = arith.subf %1, %2 : vector<8x256xf32>
    %4 = math.absf %3 : vector<8x256xf32>
    %5 = arith.addf %0, %4 : vector<8x256xf32>
    %c0_1 = arith.constant 0 : index
    %c0_2 = arith.constant 0 : index
    %6 = vector.load %arg3[%c0_1, %c0_2] : memref<1x256xf32, #tpu.memory_space<vmem>>, vector<1x256xf32>
    %7 = vector.broadcast %6 : vector<1x256xf32> to vector<8x256xf32>
    %8 = arith.mulf %5, %7 : vector<8x256xf32>
    %9 = vector.extract_strided_slice %8 {offsets = [0, 0], sizes = [8, 128], strides = [1, 1]} : vector<8x256xf32> to vector<8x128xf32>
    %10 = vector.extract_strided_slice %8 {offsets = [0, 128], sizes = [8, 128], strides = [1, 1]} : vector<8x256xf32> to vector<8x128xf32>
    %11 = arith.addf %9, %10 : vector<8x128xf32>
    %c0_3 = arith.constant 0 : index
    %c0_4 = arith.constant 0 : index
    %c0_5 = arith.constant 0 : index
    %c0_6 = arith.constant 0 : index
    %12 = vector.load %arg4[%c0_3, %c0_4, %c0_5, %c0_6] : memref<1x1x8x128xf32, #tpu.memory_space<vmem>>, vector<1x1x8x128xf32>
    %13 = vector.shape_cast %12 : vector<1x1x8x128xf32> to vector<8x128xf32>
    %14 = vector.shape_cast %11 : vector<8x128xf32> to vector<1x1x8x128xf32>
    tpu.vector_store %arg4[%c0_3, %c0_4, %c0_5, %c0_6], %14 {strides = array<i32>} : memref<1x1x8x128xf32, #tpu.memory_space<vmem>>, vector<1x1x8x128xf32>,
    return
  }
  func.func @transform_0(%arg0: i32, %arg1: i32) -> (i32, i32) {
    %c0_i32 = arith.constant 0 : i32
    return %arg0, %arg1 : i32, i32
  }
  func.func @transform_1(%arg0: i32, %arg1: i32) -> (i32, i32) {
    %c0_i32 = arith.constant 0 : i32
    %c0_i32_0 = arith.constant 0 : i32
    %c0_i32_1 = arith.constant 0 : i32
    return %c0_i32, %c0_i32_0 : i32, i32
  }
  func.func @transform_2(%arg0: i32, %arg1: i32) -> (i32, i32, i32, i32) {
    %c0_i32 = arith.constant 0 : i32
    %c0_i32_0 = arith.constant 0 : i32
    %c0_i32_1 = arith.constant 0 : i32
    return %arg0, %arg1, %c0_i32, %c0_i32_0 : i32, i32, i32, i32
  }
}

</mosaic_0001>

<llo_original>
// kernel: tpu_custom_call.1
$region0: #{tpu_custom_call.1}
  #allocation0 [shape = 'u32[]', space=smem, size = 0x4, offset = 0x4, fixed_abs, tag = 'smem constant byte address 0x4 - core index']
  #allocation1 [shape = 'u32[72,128]{1,0:T(1,128)}', space=vmem, size = 0x9000, scoped, tag = 'internal scratch']
  %s0 = inlined_call_operand.hbm [shape: f32[8,256], index: 0, kind: input, shape index: {}]
  %s1 = inlined_call_operand.hbm [shape: f32[1,256], index: 1, kind: input, shape index: {}]
  %s2 = inlined_call_operand.hbm [shape: f32[1,1,8,128], index: 2, kind: output, shape index: {}]
  %s3 = sld [smem:[#allocation0]]
  $region26: #{tpu_custom_call.1} parent=0
    _
  %s5 = ssub.s32 1, %s3
  %s6 = scalar_select 0, %s5, %s3
  $region1: #{tpu_custom_call.1} parent=0
    #allocation2 [shape = 'u8[8192]{0}', space=vmem, size = 0x2000, scoped, tag = 'input window, operand 0, single buffered']
    #allocation3 [shape = 's32[1]{0}', space=sflag, size = 0x4, scoped, tag = 'scoped memory for tpu_custom_call.1']
    #allocation4 [shape = 's32[1]{0}', space=sflag, size = 0x4, scoped, tag = 'scoped memory for tpu_custom_call.1']
    #allocation5 [shape = 'u8[1024]{0}', space=vmem, size = 0x400, scoped, tag = 'input window, operand 1, single buffered']
    #allocation6 [shape = 's32[1]{0}', space=sflag, size = 0x4, scoped, tag = 'scoped memory for tpu_custom_call.1']
    #allocation7 [shape = 'u8[4096]{0}', space=vmem, size = 0x1000, scoped, tag = 'output window, operand 0, single buffered']
    %7 = vsyncpa [#allocation3], 0
    %8 = vsyncpa [#allocation6], 0
    %9 = vsyncpa [#allocation4], 0
    // Predicated region
    $region2: #{tpu_custom_call.1} parent=1 // pred_check
      _
    $region3: #{tpu_custom_call.1} parent=1 // pred_check_branch
      %11 = sbr.rel (0) target = $region5
    $region4: #{tpu_custom_call.1} parent=1 // pred_region
      %13 = vsyncadd [#allocation3], 0
      %s15 = sshll.u32 %s0, 4
      %s16 = int_to_ptr.hbm [resolvable:$true] %s15
      %s17 = sshll.u32 [#allocation2], 4
      %s18 = int_to_ptr.vmem [resolvable:$true] %s17
      %20 = dma.hbm_to_vmem [thread:$0]  %s16, 256, %s18, [#allocation3]
    $region5: #{tpu_custom_call.1} parent=1 // pred_fallthru
      _
    // Predicated region
    $region6: #{tpu_custom_call.1} parent=1 // pred_check
      _
    $region7: #{tpu_custom_call.1} parent=1 // pred_check_branch
      %22 = sbr.rel (0) target = $region9
    $region8: #{tpu_custom_call.1} parent=1 // pred_region
      %24 = vsyncadd [#allocation6], 0
      %s26 = sshll.u32 %s1, 4
      %s27 = int_to_ptr.hbm [resolvable:$true] %s26
      %s28 = sshll.u32 [#allocation5], 4
      %s29 = int_to_ptr.vmem [resolvable:$true] %s28
      %31 = dma.hbm_to_vmem [thread:$0]  %s27, 32, %s29, [#allocation6]
    $region9: #{tpu_custom_call.1} parent=1 // pred_fallthru
      _
    // Predicated region
    $region10: #{tpu_custom_call.1} parent=1 // pred_check
      _
    $region11: #{tpu_custom_call.1} parent=1 // pred_check_branch
      %33 = sbr.rel (0) target = $region13
    $region12: #{tpu_custom_call.1} parent=1 // pred_region
      %35 = dma.done [#allocation3], 256
    $region13: #{tpu_custom_call.1} parent=1 // pred_fallthru
      _
    // Predicated region
    $region14: #{tpu_custom_call.1} parent=1 // pred_check
      _
    $region15: #{tpu_custom_call.1} parent=1 // pred_check_branch
      %37 = sbr.rel (0) target = $region17
    $region16: #{tpu_custom_call.1} parent=1 // pred_region
      %39 = dma.done [#allocation6], 32
    $region17: #{tpu_custom_call.1} parent=1 // pred_fallthru
      _
    %v40 = vld [vmem:[#allocation2] sm:$0xff]
    %v41 = vld [vmem:[#allocation2 + $0x8] sm:$0xff]
    %42 = vrot.lane.b32.xlu0 %v40, 127
    %v43 = vpop.permute.xlu0 %42
    %44 = vrot.lane.b32.xlu0 %v41, 127
    %v45 = vpop.permute.xlu0 %44
    %v46 = vlaneseq
    %v47 = vand.u32 %v46, 127
    %vm48 = vcmp.lt.s32.totalorder %v47, 127
    %v49 = vsel %vm48, %v43, %v45
    %v50 = vsel %vm48, %v45, %v43
    %v51 = vsub.f32 %v40, %v49
    %v52 = vsub.f32 %v41, %v50
    %v53 = vand.u32 2147483647, %v51
    %v54 = vand.u32 2147483647, %v52
    %v55 = vadd.f32 %v53, 0.0
    %v56 = vadd.f32 %v54, 0.0
    %v57 = vld [vmem:[#allocation5] sm:$0x3]
    %v59 = vperm.slane %v57, 0
    %v60 = vperm.slane %v57, 1
    %v63 = vmul.f32 %v55, %v59
    %v64 = vmul.f32 %v56, %v60
    %v65 = vadd.f32 %v63, %v64
    %66 = vst [vmem:[#allocation7] sm:$0xff] %v65
    // Predicated region
    $region18: #{tpu_custom_call.1} parent=1 // pred_check
      _
    $region19: #{tpu_custom_call.1} parent=1 // pred_check_branch
      %68 = sbr.rel (0) target = $region21
    $region20: #{tpu_custom_call.1} parent=1 // pred_region
      %70 = vsyncadd [#allocation4], 0
      %s72 = sshll.u32 [#allocation7], 4
      %s73 = int_to_ptr.vmem [resolvable:$true] %s72
      %s74 = sshll.u32 %s2, 4
      %s75 = int_to_ptr.hbm [resolvable:$true] %s74
      %77 = dma.vmem_to_hbm [thread:$0]  %s73, 128, %s75, [#allocation4]
    $region21: #{tpu_custom_call.1} parent=1 // pred_fallthru
      _
    // Predicated region
    $region22: #{tpu_custom_call.1} parent=1 // pred_check
      _
    $region23: #{tpu_custom_call.1} parent=1 // pred_check_branch
      %79 = sbr.rel (0) target = $region25
    $region24: #{tpu_custom_call.1} parent=1 // pred_region
      %81 = dma.done [#allocation4], 128
    $region25: #{tpu_custom_call.1} parent=1 // pred_fallthru
      _
    %82 = vsyncpa [#allocation3], 1
    %83 = vsyncpa [#allocation6], 1
    %84 = vsyncpa [#allocation4], 1

</llo_original>
